<compile_context>
chip_gen: v6e
topology: v6e:2x2x1
jax: 0.10.0
libtpu: 0.0.40
codegen_flags: <defaults>
</compile_context>

<pallas_src>
import functools

import jax
import jax.numpy as jnp
from jax.experimental import pallas as pl
from jax.experimental.pallas import tpu as pltpu

_SUBLANE = 8
# ~2 MiB f32 per block -> ~8 MiB double-buffered (in + out) working set.
_TARGET_BLOCK_ELEMS = 512 * 1024


def _logistic_kernel(x0, k_ref, x_ref, o_ref):
    # k lives in SMEM, shape (1,) (mirrors nn.Parameter(FloatTensor([k]))).
    k = k_ref[0]
    # Compute in f32 (v5e has no bf16 VPU/EUP); stream I/O in native dtype.
    x = x_ref[...].astype(jnp.float32)
    y = 1.0 / (1.0 + jnp.exp(-k * (x - x0)))  # already in [0, 1]; no clip needed
    o_ref[...] = y.astype(o_ref.dtype)


def _pick_lane_width(n):
    """Widest lane-dense slab width that needs no padding (fallback: 512)."""
    for w in (1024, 512, 256, 128):
        if n % (w * _SUBLANE) == 0:
            return w
    return 512


def logistic_activation(x, k_param, x0=0.0):
    """Generalized sigmoid, elementwise, as a single-pass Pallas TPU kernel.

    Matches LogisticActivation.forward:
        clamp(1 / (1 + exp(-k * (x - x0))), 0, 1).squeeze()

    x:        any-shape float array (e.g. NCHW from PyTorch).
    k_param:  shape-(1,) float array (the trainable slope parameter).
    x0:       python float midpoint.
    """
    orig_shape = x.shape
    dtype = x.dtype
    n = x.size

    w = _pick_lane_width(n)
    rows = pl.cdiv(n, w)
    rows = pl.cdiv(rows, _SUBLANE) * _SUBLANE  # sublane-align the slab
    padded = rows * w

    flat = x.reshape(-1)
    if padded != n:
        # Tail-only padding (< 8*w elements); skipped when n is already aligned.
        flat = jnp.pad(flat, (0, padded - n))
    x2d = flat.reshape(rows, w)

    tile_rows = min(max(_TARGET_BLOCK_ELEMS // w, _SUBLANE), rows)
    grid = (pl.cdiv(rows, tile_rows),)  # ragged last block handled by Pallas

    # TODO(synk): if the caller can donate x, add input_output_aliases={1: 0}
    # to reuse the input HBM buffer for the output.
    out2d = pl.pallas_call(
        functools.partial(_logistic_kernel, float(x0)),
        out_shape=jax.ShapeDtypeStruct((rows, w), dtype),
        grid_spec=pltpu.PrefetchScalarGridSpec(
            num_scalar_prefetch=0,
            grid=grid,
            in_specs=[
                pl.BlockSpec(memory_space=pltpu.SMEM),           # k parameter
                pl.BlockSpec((tile_rows, w), lambda i: (i, 0)),  # x tile
            ],
            out_specs=pl.BlockSpec((tile_rows, w), lambda i: (i, 0)),
        ),
        compiler_params=pltpu.CompilerParams(
            # "parallel" lets v7x shard the 1-D grid across both TensorCores.
            dimension_semantics=("parallel",),
        ),
    )(k_param.astype(jnp.float32), x2d)

    out = out2d.reshape(-1)
    if padded != n:
        out = out[:n]
    out = out.reshape(orig_shape)

    # torch .squeeze(): drop all size-1 dims.
    squeeze_axes = tuple(i for i, d in enumerate(orig_shape) if d == 1)
    if squeeze_axes:
        out = jnp.squeeze(out, axis=squeeze_axes)
    return out


if __name__ == "__main__":
    key = jax.random.PRNGKey(0)

    # Deterministic parameter init (module __init__: k=1.0 as a length-1 tensor, x0=0).
    k_param = jnp.array([1.0], dtype=jnp.float32)
    x0 = 0.0

    def ref_fn(x):
        xf = x.astype(jnp.float32)
        r = jnp.clip(1.0 / (1.0 + jnp.exp(-k_param[0] * (xf - x0))), 0.0, 1.0)
        sq = tuple(i for i, d in enumerate(x.shape) if d == 1)
        return jnp.squeeze(r, axis=sq) if sq else r

    # 1) Primary check: small NCHW-style f32 input (aligned, pad-free path).
    x = jax.random.normal(key, (2, 4, 16, 16), dtype=jnp.float32)
    out = jax.block_until_ready(logistic_activation(x, k_param, x0))
    ref = ref_fn(x)
    assert out.shape == ref.shape
    assert jnp.allclose(out, ref, atol=1e-6, rtol=1e-6)

    # 2) Ragged + squeeze path: tiny unaligned shape with a size-1 dim.
    x2 = jax.random.normal(jax.random.PRNGKey(1), (1, 5, 7), dtype=jnp.float32)
    out2 = jax.block_until_ready(logistic_activation(x2, k_param, x0))
    ref2 = ref_fn(x2)
    assert out2.shape == ref2.shape == (5, 7)
    assert jnp.allclose(out2, ref2, atol=1e-6, rtol=1e-6)

    # 3) Native-dtype streaming: bf16 in -> bf16 out (f32 compute in-kernel).
    xb = jax.random.normal(jax.random.PRNGKey(2), (2, 4, 16, 16), dtype=jnp.bfloat16)
    outb = jax.block_until_ready(logistic_activation(xb, k_param, x0))
    refb = ref_fn(xb).astype(jnp.bfloat16)
    assert outb.dtype == jnp.bfloat16 and outb.shape == refb.shape
    assert jnp.allclose(outb.astype(jnp.float32), refb.astype(jnp.float32), atol=1e-2)

    print("KERNEL_OK")
</pallas_src>

<mosaic_0001>
module attributes {stable_mosaic.version = 11 : i64} {
  func.func @_logistic_kernel(%arg0: i32, %arg1: memref<1xf32, #tpu.memory_space<smem>>, %arg2: memref<8x256xf32, #tpu.memory_space<vmem>>, %arg3: memref<8x256xf32, #tpu.memory_space<vmem>>) attributes {dimension_semantics = [#tpu.dimension_semantics<parallel>], iteration_bounds = array<i64: 1>, scalar_prefetch = 0 : i64, scratch_operands = 0 : i64, tpu.core_type = #tpu.core_type<tc>, window_params = [{transform_indices = @transform_0, window_bounds = array<i64: 1>}, {transform_indices = @transform_1, window_bounds = array<i64: 8, 256>}, {transform_indices = @transform_2, window_bounds = array<i64: 8, 256>}]} {
    %c0 = arith.constant 0 : index
    %0 = memref.load %arg1[%c0] : memref<1xf32, #tpu.memory_space<smem>>
    %c0_0 = arith.constant 0 : index
    %c0_1 = arith.constant 0 : index
    %1 = vector.load %arg2[%c0_0, %c0_1] : memref<8x256xf32, #tpu.memory_space<vmem>>, vector<8x256xf32>
    %cst = arith.constant 0.000000e+00 : f32
    %2 = arith.subf %cst, %0 : f32
    %cst_2 = arith.constant 0.000000e+00 : f32
    %3 = vector.broadcast %cst_2 : f32 to vector<8x256xf32>
    %4 = arith.subf %1, %3 : vector<8x256xf32>
    %5 = vector.broadcast %2 : f32 to vector<8x256xf32>
    %6 = arith.mulf %5, %4 : vector<8x256xf32>
    %7 = math.exp %6 : vector<8x256xf32>
    %cst_3 = arith.constant 1.000000e+00 : f32
    %8 = vector.broadcast %cst_3 : f32 to vector<8x256xf32>
    %9 = arith.addf %8, %7 : vector<8x256xf32>
    %cst_4 = arith.constant 1.000000e+00 : f32
    %10 = vector.broadcast %cst_4 : f32 to vector<8x256xf32>
    %11 = arith.divf %10, %9 : vector<8x256xf32>
    %c0_5 = arith.constant 0 : index
    %c0_6 = arith.constant 0 : index
    %12 = vector.load %arg3[%c0_5, %c0_6] : memref<8x256xf32, #tpu.memory_space<vmem>>, vector<8x256xf32>
    tpu.vector_store %arg3[%c0_5, %c0_6], %11 {strides = array<i32>} : memref<8x256xf32, #tpu.memory_space<vmem>>, vector<8x256xf32>,
    return
  }
  func.func @transform_0(%arg0: i32) -> i32 {
    %c0_i32 = arith.constant 0 : i32
    %c0_i32_0 = arith.constant 0 : i32
    return %c0_i32 : i32
  }
  func.func @transform_1(%arg0: i32) -> (i32, i32) {
    %c0_i32 = arith.constant 0 : i32
    %c0_i32_0 = arith.constant 0 : i32
    return %arg0, %c0_i32 : i32, i32
  }
  func.func @transform_2(%arg0: i32) -> (i32, i32) {
    %c0_i32 = arith.constant 0 : i32
    %c0_i32_0 = arith.constant 0 : i32
    return %arg0, %c0_i32 : i32, i32
  }
}

</mosaic_0001>

<llo_original>
// kernel: tpu_custom_call.1
$region0: #{tpu_custom_call.1}
  #allocation0 [shape = 'u32[]', space=smem, size = 0x4, offset = 0x4, fixed_abs, tag = 'smem constant byte address 0x4 - core index']
  #allocation1 [shape = 'u32[144,128]{1,0:T(1,128)}', space=vmem, size = 0x12000, scoped, tag = 'internal scratch']
  #allocation2 [shape = 'f32[1]{0:T(128)S(6)}', space=smem, size = 0x200, scoped, tag = 'scoped memory for tpu_custom_call.1']
  %s0 = inlined_call_operand.<no memory space> [shape: f32[1], index: 0, kind: input, shape index: {}]
  %s1 = inlined_call_operand.hbm [shape: f32[8,256], index: 1, kind: input, shape index: {}]
  %s2 = inlined_call_operand.hbm [shape: f32[8,256], index: 2, kind: output, shape index: {}]
  %s3 = sld [smem:[#allocation0]]
  $region22: #{tpu_custom_call.1} parent=0
    _
  %s5 = ssub.s32 1, %s3
  %s6 = scalar_select 0, %s5, %s3
  %7 = sst [smem:[#allocation2]] %s0
  $region1: #{tpu_custom_call.1} parent=0
    #allocation3 [shape = 'u8[8192]{0}', space=vmem, size = 0x2000, scoped, tag = 'input window, operand 1, single buffered']
    #allocation4 [shape = 's32[1]{0}', space=sflag, size = 0x4, scoped, tag = 'scoped memory for tpu_custom_call.1']
    #allocation5 [shape = 's32[1]{0}', space=sflag, size = 0x4, scoped, tag = 'scoped memory for tpu_custom_call.1']
    #allocation6 [shape = 'u8[8192]{0}', space=vmem, size = 0x2000, scoped, tag = 'output window, operand 0, single buffered']
    %8 = vsyncpa [#allocation4], 0
    %9 = vsyncpa [#allocation5], 0
    // Predicated region
    $region2: #{tpu_custom_call.1} parent=1 // pred_check
      _
    $region3: #{tpu_custom_call.1} parent=1 // pred_check_branch
      %11 = sbr.rel (0) target = $region5
    $region4: #{tpu_custom_call.1} parent=1 // pred_region
      _
    $region5: #{tpu_custom_call.1} parent=1 // pred_fallthru
      _
    // Predicated region
    $region6: #{tpu_custom_call.1} parent=1 // pred_check
      _
    $region7: #{tpu_custom_call.1} parent=1 // pred_check_branch
      %13 = sbr.rel (0) target = $region9
    $region8: #{tpu_custom_call.1} parent=1 // pred_region
      %s15 = ssub.s32 256, 256
      %16 = vsyncadd [#allocation4], %s15
      %s18 = sshll.u32 [#allocation3], 4
      %s19 = int_to_ptr.vmem [resolvable:$true] %s18
      %21 = dma.hbm_to_vmem [thread:$0]  %s1, 256, %s19, [#allocation4]
    $region9: #{tpu_custom_call.1} parent=1 // pred_fallthru
      _
    // Predicated region
    $region10: #{tpu_custom_call.1} parent=1 // pred_check
      _
    $region11: #{tpu_custom_call.1} parent=1 // pred_check_branch
      %23 = sbr.rel (0) target = $region13
    $region12: #{tpu_custom_call.1} parent=1 // pred_region
      %24 = dma.done [#allocation4], 256
    $region13: #{tpu_custom_call.1} parent=1 // pred_fallthru
      _
    %s25 = sld [smem:[#allocation2]]
    %v26 = vld [vmem:[#allocation3] sm:$0xff]
    %v27 = vld [vmem:[#allocation3 + $0x8] sm:$0xff]
    %s28 = ssub.f32 0.0, %s25
    %v29 = vstv %s28
    %v30 = vmul.f32 %v29, %v26
    %v31 = vmul.f32 %v29, %v27
    %v32 = vmul.f32 %v30, 1.442695
    %v33 = vpow.pop %v32
    %v34 = vmul.f32 %v31, 1.442695
    %v35 = vpow.pop %v34
    %v36 = vadd.f32 %v33, 1.0
    %v37 = vadd.f32 %v35, 1.0
    %v38 = vrcp.pop %v36
    %v39 = vmul.f32 1.0, %v38
    %v40 = vrcp.pop %v37
    %v41 = vmul.f32 1.0, %v40
    %42 = vst [vmem:[#allocation6] sm:$0xff] %v39
    %43 = vst [vmem:[#allocation6 + $0x8] sm:$0xff] %v41
    // Predicated region
    $region14: #{tpu_custom_call.1} parent=1 // pred_check
      _
    $region15: #{tpu_custom_call.1} parent=1 // pred_check_branch
      %45 = sbr.rel (0) target = $region17
    $region16: #{tpu_custom_call.1} parent=1 // pred_region
      %s47 = ssub.s32 256, 256
      %48 = vsyncadd [#allocation5], %s47
      %s50 = sshll.u32 [#allocation6], 4
      %s51 = int_to_ptr.vmem [resolvable:$true] %s50
      %53 = dma.vmem_to_hbm [thread:$0]  %s51, 256, %s2, [#allocation5]
    $region17: #{tpu_custom_call.1} parent=1 // pred_fallthru
      _
    // Predicated region
    $region18: #{tpu_custom_call.1} parent=1 // pred_check
      _
    $region19: #{tpu_custom_call.1} parent=1 // pred_check_branch
      %55 = sbr.rel (0) target = $region21
    $region20: #{tpu_custom_call.1} parent=1 // pred_region
      %56 = dma.done [#allocation5], 256
    $region21: #{tpu_custom_call.1} parent=1 // pred_fallthru
      _
    %57 = vsyncpa [#allocation4], 1
    %58 = vsyncpa [#allocation5], 1

</llo_original>
